<compile_context>
chip_gen: v7x
topology: tpu7x:2x2x1
jax: 0.10.0
libtpu: 0.0.40
codegen_flags: <defaults>
</compile_context>

<pallas_src>
import jax
import jax.numpy as jnp
from jax.experimental import pallas as pl
from jax.experimental.pallas import tpu as pltpu


_MAX_T1 = 8  # static unroll bound for the per-channel copy loop inside the kernel


def _round_up(a, m):
    return -(-a // m) * m


def _sublane_multiple(itemsize):
    # Native second-minor granularity: 8 rows for 32-bit, 16 for 16-bit, 32 for 8-bit.
    return 8 * max(1, 4 // itemsize)


def _vmem_budget_bytes():
    """Scoped-VMEM budget we request, derived from the chip's physical VMEM."""
    try:
        cap = int(getattr(pltpu.get_tpu_info(), "vmem_capacity_bytes"))
        if cap <= 0:
            raise ValueError
    except Exception:  # no TPU info available -> assume the smallest (v7x: 64 MiB)
        cap = 64 << 20
    scoped = min(cap // 2, 64 << 20)   # v5e/v6e -> 64 MiB, v7x -> 32 MiB
    return max(scoped, 16 << 20)


def _pick_tiles(D1, D2, D3, itemsize):
    """Tile sizes from the *padded* VMEM footprint (review item #2).

    Input block  (1, t1, t2, D3)   padded ~ t1 * t2 * round_up(D3, 128) * itemsize
    Output block (1, t2, t1*D3)    padded ~ t2 * round_up(t1*D3, 128) * itemsize
    """
    sub = _sublane_multiple(itemsize)
    scoped = _vmem_budget_bytes()
    # Per (in+out) block pair, before Pallas' 2x double buffering -> ~scoped/2 resident.
    pair_target = 2 * (scoped // 8)

    t1 = min(D1, _MAX_T1)

    def row_bytes(t1_):  # padded bytes contributed by one row of the D2 tile
        return (t1_ * _round_up(D3, 128) + _round_up(t1_ * D3, 128)) * itemsize

    rb = row_bytes(t1)
    while t1 > 1 and sub * rb > pair_target:   # shrink the channel tile first
        t1 = max(1, t1 // 2)
        rb = row_bytes(t1)

    if D2 * rb <= pair_target:
        t2 = D2                                 # full dim: always layout-legal
    else:
        t2 = max(sub, (pair_target // rb) // sub * sub)   # sublane-aligned, cdiv grid
        t2 = min(t2, D2)
    return t1, t2, scoped


def _permute_0213_kernel(x_ref, o_ref):
    """x_ref: (1, t1, t2, D3)  ->  o_ref: (1, t2, t1*D3)  (output folded over (D1, D3)).

    The middle-dim swap is an in-register relayout (review item #1): channel c's
    contiguous (t2, D3) slab is loaded and stored at lane offset c*D3 of the
    lane-dense output tile.  D3 is a multiple of 128 on this path, so every
    store is an unmasked, vreg-aligned vst; no XLU transpose, no DMA descriptors
    and no semaphores are involved.  t1 is capped (<= 8) so the unroll is tiny.
    """
    t1 = x_ref.shape[1]
    d3 = x_ref.shape[3]
    for c in range(t1):                      # small static unroll
        o_ref[0, :, c * d3:(c + 1) * d3] = x_ref[0, c, :, :]


def _pallas_permute_0213(x):
    """torch `x.permute(0, 2, 1, 3)` as a tiled Pallas TPU copy kernel.

    Requires x.shape[-1] % 128 == 0 (lane-aligned last dim).
    """
    B, D1, D2, D3 = x.shape
    itemsize = x.dtype.itemsize
    t1, t2, scoped = _pick_tiles(D1, D2, D3, itemsize)
    grid = (B, pl.cdiv(D2, t2), pl.cdiv(D1, t1))

    out_folded = pl.pallas_call(
        _permute_0213_kernel,
        out_shape=jax.ShapeDtypeStruct((B, D2, D1 * D3), x.dtype),
        grid=grid,
        in_specs=[
            # Last two block dims (t2, D3): t2 is sublane-aligned (or the full
            # dim) and D3 is the full, 128-aligned lane dim -> unmasked DMAs.
            pl.BlockSpec((1, t1, t2, D3), lambda b, j, c: (b, c, j, 0)),
        ],
        # Folded, lane-dense output: last block dim t1*D3 is a multiple of 128
        # (review item #3), so writeback rows are large contiguous slabs.
        out_specs=pl.BlockSpec((1, t2, t1 * D3), lambda b, j, c: (b, j, c)),
        compiler_params=pltpu.CompilerParams(
            # Every block writes a disjoint output region -> all axes parallel
            # (lets v7x shard the copy across its two TensorCores).
            dimension_semantics=("parallel", "parallel", "parallel"),
            vmem_limit_bytes=scoped,
        ),
        cost_estimate=pl.CostEstimate(
            flops=0, transcendentals=0, bytes_accessed=2 * x.size * itemsize),
    )(x)
    return out_folded.reshape(B, D2, D1, D3)   # un-fold: contiguous, metadata-only


def reshape_forward(x, reshape_type: int):
    """Reproduces Reshape(type).forward(x) from model/net_model_lw.py."""
    if reshape_type == -1:
        if x.ndim != 4:
            raise ValueError("Reshape(-1) == permute(0, 2, 1, 3) needs a 4-D input")
        B, D1, D2, D3 = x.shape
        if D1 == 1 or D2 == 1:
            # Swapping a size-1 dim is a pure relabel -> metadata-only reshape.
            return x.reshape(B, D2, D1, D3)
        if D3 % 128 == 0:
            return _pallas_permute_0213(x)
        # Sub-128 last dim: masked partial stores, up to 8x VMEM padding and tiny
        # strided rows make a dedicated kernel counterproductive here (review
        # item #3) -> let XLA handle the transpose.
        # TODO(synk): lane-dense fold ((B,D1,D2*D3)->(B,D2,D1*D3)) Pallas variant
        # for sub-128 last dims, once the in-kernel unaligned-lane interleave is
        # validated on all target generations.
        return jnp.transpose(x, (0, 2, 1, 3))
    # x.view(-1, type): pure shape metadata, no data movement -> no kernel
    # (review item #1: a copy kernel here only adds a full HBM round trip).
    return x.reshape(-1, reshape_type)


if __name__ == "__main__":
    key = jax.random.PRNGKey(0)
    k1, k2, k3 = jax.random.split(key, 3)

    # Path 1: type == -1 with a lane-aligned head dim (B, H, S, Dh) -> Pallas kernel.
    x = jax.random.normal(k1, (2, 16, 32, 128), dtype=jnp.float32)
    y = jax.block_until_ready(reshape_forward(x, -1))
    assert y.shape == (2, 32, 16, 128), y.shape
    assert jnp.array_equal(y, jnp.transpose(x, (0, 2, 1, 3))), "permute values mismatch"

    # Path 1b: sub-128 last dim -> review-endorsed XLA transpose fallback.
    x2 = jax.random.normal(k2, (2, 4, 16, 16), dtype=jnp.float32)
    y2 = jax.block_until_ready(reshape_forward(x2, -1))
    assert y2.shape == (2, 16, 4, 16), y2.shape
    assert jnp.array_equal(y2, jnp.transpose(x2, (0, 2, 1, 3))), "fallback values mismatch"

    # Path 2: type > 0 -> view(-1, type).  Metadata-only reshape (no kernel).
    x3 = jax.random.normal(k3, (2, 4, 16, 16), dtype=jnp.float32)
    y3 = jax.block_until_ready(reshape_forward(x3, 256))
    assert y3.shape == (8, 256), y3.shape
    assert jnp.array_equal(y3, x3.reshape(-1, 256)), "view values mismatch"

    print("KERNEL_OK")
</pallas_src>

<mosaic_0001>
module attributes {stable_mosaic.version = 11 : i64} {
  func.func @_permute_0213_kernel(%arg0: i32, %arg1: i32, %arg2: i32, %arg3: memref<1x8x32x128xf32, #tpu.memory_space<vmem>>, %arg4: memref<1x32x1024xf32, #tpu.memory_space<vmem>>) attributes {dimension_semantics = [#tpu.dimension_semantics<parallel>, #tpu.dimension_semantics<parallel>, #tpu.dimension_semantics<parallel>], iteration_bounds = array<i64: 2, 1, 2>, scalar_prefetch = 0 : i64, scratch_operands = 0 : i64, tpu.core_type = #tpu.core_type<tc>, window_params = [{transform_indices = @transform_0, window_bounds = array<i64: 1, 8, 32, 128>}, {transform_indices = @transform_1, window_bounds = array<i64: 1, 32, 1024>}]} {
    %c0 = arith.constant 0 : index
    %c0_0 = arith.constant 0 : index
    %c0_1 = arith.constant 0 : index
    %c0_2 = arith.constant 0 : index
    %0 = vector.load %arg3[%c0, %c0_0, %c0_1, %c0_2] : memref<1x8x32x128xf32, #tpu.memory_space<vmem>>, vector<1x1x32x128xf32>
    %1 = vector.shape_cast %0 : vector<1x1x32x128xf32> to vector<32x128xf32>
    %c0_3 = arith.constant 0 : index
    %c0_4 = arith.constant 0 : index
    %c0_5 = arith.constant 0 : index
    %2 = vector.load %arg4[%c0_3, %c0_4, %c0_5] : memref<1x32x1024xf32, #tpu.memory_space<vmem>>, vector<1x32x128xf32>
    %3 = vector.shape_cast %2 : vector<1x32x128xf32> to vector<32x128xf32>
    %4 = vector.shape_cast %1 : vector<32x128xf32> to vector<1x32x128xf32>
    tpu.vector_store %arg4[%c0_3, %c0_4, %c0_5], %4 {strides = array<i32>} : memref<1x32x1024xf32, #tpu.memory_space<vmem>>, vector<1x32x128xf32>,
    %c0_6 = arith.constant 0 : index
    %c1 = arith.constant 1 : index
    %c0_7 = arith.constant 0 : index
    %c0_8 = arith.constant 0 : index
    %5 = vector.load %arg3[%c0_6, %c1, %c0_7, %c0_8] : memref<1x8x32x128xf32, #tpu.memory_space<vmem>>, vector<1x1x32x128xf32>
    %6 = vector.shape_cast %5 : vector<1x1x32x128xf32> to vector<32x128xf32>
    %c0_9 = arith.constant 0 : index
    %c0_10 = arith.constant 0 : index
    %c128 = arith.constant 128 : index
    %7 = vector.load %arg4[%c0_9, %c0_10, %c128] : memref<1x32x1024xf32, #tpu.memory_space<vmem>>, vector<1x32x128xf32>
    %8 = vector.shape_cast %7 : vector<1x32x128xf32> to vector<32x128xf32>
    %9 = vector.shape_cast %6 : vector<32x128xf32> to vector<1x32x128xf32>
    tpu.vector_store %arg4[%c0_9, %c0_10, %c128], %9 {strides = array<i32>} : memref<1x32x1024xf32, #tpu.memory_space<vmem>>, vector<1x32x128xf32>,
    %c0_11 = arith.constant 0 : index
    %c2 = arith.constant 2 : index
    %c0_12 = arith.constant 0 : index
    %c0_13 = arith.constant 0 : index
    %10 = vector.load %arg3[%c0_11, %c2, %c0_12, %c0_13] : memref<1x8x32x128xf32, #tpu.memory_space<vmem>>, vector<1x1x32x128xf32>
    %11 = vector.shape_cast %10 : vector<1x1x32x128xf32> to vector<32x128xf32>
    %c0_14 = arith.constant 0 : index
    %c0_15 = arith.constant 0 : index
    %c256 = arith.constant 256 : index
    %12 = vector.load %arg4[%c0_14, %c0_15, %c256] : memref<1x32x1024xf32, #tpu.memory_space<vmem>>, vector<1x32x128xf32>
    %13 = vector.shape_cast %12 : vector<1x32x128xf32> to vector<32x128xf32>
    %14 = vector.shape_cast %11 : vector<32x128xf32> to vector<1x32x128xf32>
    tpu.vector_store %arg4[%c0_14, %c0_15, %c256], %14 {strides = array<i32>} : memref<1x32x1024xf32, #tpu.memory_space<vmem>>, vector<1x32x128xf32>,
    %c0_16 = arith.constant 0 : index
    %c3 = arith.constant 3 : index
    %c0_17 = arith.constant 0 : index
    %c0_18 = arith.constant 0 : index
    %15 = vector.load %arg3[%c0_16, %c3, %c0_17, %c0_18] : memref<1x8x32x128xf32, #tpu.memory_space<vmem>>, vector<1x1x32x128xf32>
    %16 = vector.shape_cast %15 : vector<1x1x32x128xf32> to vector<32x128xf32>
    %c0_19 = arith.constant 0 : index
    %c0_20 = arith.constant 0 : index
    %c384 = arith.constant 384 : index
    %17 = vector.load %arg4[%c0_19, %c0_20, %c384] : memref<1x32x1024xf32, #tpu.memory_space<vmem>>, vector<1x32x128xf32>
    %18 = vector.shape_cast %17 : vector<1x32x128xf32> to vector<32x128xf32>
    %19 = vector.shape_cast %16 : vector<32x128xf32> to vector<1x32x128xf32>
    tpu.vector_store %arg4[%c0_19, %c0_20, %c384], %19 {strides = array<i32>} : memref<1x32x1024xf32, #tpu.memory_space<vmem>>, vector<1x32x128xf32>,
    %c0_21 = arith.constant 0 : index
    %c4 = arith.constant 4 : index
    %c0_22 = arith.constant 0 : index
    %c0_23 = arith.constant 0 : index
    %20 = vector.load %arg3[%c0_21, %c4, %c0_22, %c0_23] : memref<1x8x32x128xf32, #tpu.memory_space<vmem>>, vector<1x1x32x128xf32>
    %21 = vector.shape_cast %20 : vector<1x1x32x128xf32> to vector<32x128xf32>
    %c0_24 = arith.constant 0 : index
    %c0_25 = arith.constant 0 : index
    %c512 = arith.constant 512 : index
    %22 = vector.load %arg4[%c0_24, %c0_25, %c512] : memref<1x32x1024xf32, #tpu.memory_space<vmem>>, vector<1x32x128xf32>
    %23 = vector.shape_cast %22 : vector<1x32x128xf32> to vector<32x128xf32>
    %24 = vector.shape_cast %21 : vector<32x128xf32> to vector<1x32x128xf32>
    tpu.vector_store %arg4[%c0_24, %c0_25, %c512], %24 {strides = array<i32>} : memref<1x32x1024xf32, #tpu.memory_space<vmem>>, vector<1x32x128xf32>,
    %c0_26 = arith.constant 0 : index
    %c5 = arith.constant 5 : index
    %c0_27 = arith.constant 0 : index
    %c0_28 = arith.constant 0 : index
    %25 = vector.load %arg3[%c0_26, %c5, %c0_27, %c0_28] : memref<1x8x32x128xf32, #tpu.memory_space<vmem>>, vector<1x1x32x128xf32>
    %26 = vector.shape_cast %25 : vector<1x1x32x128xf32> to vector<32x128xf32>
    %c0_29 = arith.constant 0 : index
    %c0_30 = arith.constant 0 : index
    %c640 = arith.constant 640 : index
    %27 = vector.load %arg4[%c0_29, %c0_30, %c640] : memref<1x32x1024xf32, #tpu.memory_space<vmem>>, vector<1x32x128xf32>
    %28 = vector.shape_cast %27 : vector<1x32x128xf32> to vector<32x128xf32>
    %29 = vector.shape_cast %26 : vector<32x128xf32> to vector<1x32x128xf32>
    tpu.vector_store %arg4[%c0_29, %c0_30, %c640], %29 {strides = array<i32>} : memref<1x32x1024xf32, #tpu.memory_space<vmem>>, vector<1x32x128xf32>,
    %c0_31 = arith.constant 0 : index
    %c6 = arith.constant 6 : index
    %c0_32 = arith.constant 0 : index
    %c0_33 = arith.constant 0 : index
    %30 = vector.load %arg3[%c0_31, %c6, %c0_32, %c0_33] : memref<1x8x32x128xf32, #tpu.memory_space<vmem>>, vector<1x1x32x128xf32>
    %31 = vector.shape_cast %30 : vector<1x1x32x128xf32> to vector<32x128xf32>
    %c0_34 = arith.constant 0 : index
    %c0_35 = arith.constant 0 : index
    %c768 = arith.constant 768 : index
    %32 = vector.load %arg4[%c0_34, %c0_35, %c768] : memref<1x32x1024xf32, #tpu.memory_space<vmem>>, vector<1x32x128xf32>
    %33 = vector.shape_cast %32 : vector<1x32x128xf32> to vector<32x128xf32>
    %34 = vector.shape_cast %31 : vector<32x128xf32> to vector<1x32x128xf32>
    tpu.vector_store %arg4[%c0_34, %c0_35, %c768], %34 {strides = array<i32>} : memref<1x32x1024xf32, #tpu.memory_space<vmem>>, vector<1x32x128xf32>,
    %c0_36 = arith.constant 0 : index
    %c7 = arith.constant 7 : index
    %c0_37 = arith.constant 0 : index
    %c0_38 = arith.constant 0 : index
    %35 = vector.load %arg3[%c0_36, %c7, %c0_37, %c0_38] : memref<1x8x32x128xf32, #tpu.memory_space<vmem>>, vector<1x1x32x128xf32>
    %36 = vector.shape_cast %35 : vector<1x1x32x128xf32> to vector<32x128xf32>
    %c0_39 = arith.constant 0 : index
    %c0_40 = arith.constant 0 : index
    %c896 = arith.constant 896 : index
    %37 = vector.load %arg4[%c0_39, %c0_40, %c896] : memref<1x32x1024xf32, #tpu.memory_space<vmem>>, vector<1x32x128xf32>
    %38 = vector.shape_cast %37 : vector<1x32x128xf32> to vector<32x128xf32>
    %39 = vector.shape_cast %36 : vector<32x128xf32> to vector<1x32x128xf32>
    tpu.vector_store %arg4[%c0_39, %c0_40, %c896], %39 {strides = array<i32>} : memref<1x32x1024xf32, #tpu.memory_space<vmem>>, vector<1x32x128xf32>,
    return
  }
  func.func @transform_0(%arg0: i32, %arg1: i32, %arg2: i32) -> (i32, i32, i32, i32) {
    %c0_i32 = arith.constant 0 : i32
    %c0_i32_0 = arith.constant 0 : i32
    return %arg0, %arg2, %arg1, %c0_i32 : i32, i32, i32, i32
  }
  func.func @transform_1(%arg0: i32, %arg1: i32, %arg2: i32) -> (i32, i32, i32) {
    %c0_i32 = arith.constant 0 : i32
    return %arg0, %arg1, %arg2 : i32, i32, i32
  }
}

</mosaic_0001>

<llo_original>
// kernel: tpu_custom_call.1
$region0: #{tpu_custom_call.1}
  #allocation0 [shape = 'u32[]', space=smem, size = 0x4, offset = 0x4, fixed_abs, tag = 'smem constant byte address 0x4 - core index']
  #allocation1 [shape = 'u32[144,128]{1,0:T(1,128)}', space=vmem, size = 0x12000, scoped, tag = 'internal scratch']
  %s0 = inlined_call_operand.hbm [shape: f32[2,16,32,128], index: 0, kind: input, shape index: {}]
  %s1 = inlined_call_operand.hbm [shape: f32[2,32,2048], index: 1, kind: output, shape index: {}]
  %s2 = sld [smem:[#allocation0]]
  $region41: #{tpu_custom_call.1} parent=0
    _
  %s4 = ssub.s32 1, %s2
  %s5 = scalar_select 0, %s4, %s2
  $region1: #{tpu_custom_call.1} parent=0
    #allocation2 [shape = 'u8[262144]{0}', space=vmem, size = 0x40000, scoped, tag = 'input window, operand 0']
    #allocation3 [shape = 's32[2]{0}', space=sflag, size = 0x8, scoped, tag = 'scoped memory for tpu_custom_call.1']
    #allocation4 [shape = 's32[2]{0}', space=sflag, size = 0x8, scoped, tag = 'scoped memory for tpu_custom_call.1']
    #allocation5 [shape = 'u8[262144]{0}', space=vmem, size = 0x40000, scoped, tag = 'output window, operand 0']
    %6 = vsyncpa [#allocation3], 0
    %s7 = scalar_lea.sflag [#allocation3], 1
    %8 = vsyncpa %s7, 0
    %9 = vsyncpa [#allocation4], 0
    %s10 = scalar_lea.sflag [#allocation4], 1
    %11 = vsyncpa %s10, 0
    loop: start=0, step=1, limit=6
    $region2: #{tpu_custom_call.1} parent=1 // loop_pre_header
      _
    $region3: #{tpu_custom_call.1} parent=1 // loop_header
      %s13 = sphi 0, %s17
      %p14 = scmp.ge.s32.totalorder %s13, 6
      %s20 = sphi 0, %s39
      %s21 = sphi 0, %s35
      %s22 = sphi 0, %s31
      %s23 = sphi 0, %s20
      %s24 = sphi 0, %s21
      %s25 = sphi 0, %s22
      %s26 = sphi 0, %s23
      %s27 = sphi 0, %s24
      %s28 = sphi 0, %s25
      %s46 = sphi 0, %s48
      %s49 = sphi 0, %s46
      %s50 = sphi 0, %s49
      %s66 = sphi 0, %s50
      %s76 = sphi 0, %s78
      %s79 = sphi 0, %s76
      %s80 = sphi 0, %s79
      %s96 = sphi 0, %s80
    $region4: #{tpu_custom_call.1} parent=1 // loop_header_branch
      %16 = sbr.rel (%p14) target = $region8
    $region5: #{tpu_custom_call.1} parent=1 // loop_body
      %s18 = ssub.s32 %s13, 1
      %s19 = ssub.s32 %s13, 2
      %s29 = sadd.s32 1, %s22
      %p30 = scmp.ge.s32.totalorder %s29, 2
      %s31 = scalar_select %p30, 0, %s29
      %s32 = sadd.s32 1, %s21
      %s33 = scalar_select %p30, %s32, %s21
      %p34 = scmp.ge.s32.totalorder %s33, 1
      %s35 = scalar_select %p34, 0, %s33
      %s36 = sadd.s32 1, %s20
      %s37 = scalar_select %p34, %s36, %s20
      %p38 = scmp.ge.s32.totalorder %s37, 2
      %s39 = scalar_select %p38, 0, %s37
      %s40 = ssub.s32 %s20, %s39
      %s41 = ssub.s32 %s22, %s31
      %s42 = sor.u32 %s40, %s41
      %s43 = ssub.s32 %s21, %s35
      %s44 = sor.u32 %s42, %s43
      %p45 = scmp.eq.s32.totalorder %s44, 0
      %s47 = sadd.s32 %s46, 1
      %s48 = scalar_select %p45, %s46, %s47
      %p51 = pneg %p45
      %p52 = scmp.eq.s32.totalorder %s13, 3
      %p53 = por %p51, %p52
      %p54 = scmp.ne.s32.totalorder %s46, %s49
      %p55 = scmp.eq.s32.totalorder %s13, 0
      %p56 = por %p54, %p55
      %p57 = scmp.ne.s32.totalorder %s46, %s49
      %p58 = scmp.eq.s32.totalorder %s18, 3
      %p59 = por %p57, %p58
      %p60 = scmp.ne.s32.totalorder %s49, %s50
      %p61 = scmp.eq.s32.totalorder %s18, 0
      %p62 = por %p60, %p61
      %p63 = scmp.ne.s32.totalorder %s49, %s50
      %p64 = scmp.eq.s32.totalorder %s19, 3
      %p65 = por %p63, %p64
      %p67 = scmp.ne.s32.totalorder %s50, %s66
      %p68 = scmp.eq.s32.totalorder %s19, 0
      %p69 = por %p67, %p68
      %s70 = ssub.s32 %s20, %s39
      %s71 = ssub.s32 %s21, %s35
      %s72 = sor.u32 %s70, %s71
      %s73 = ssub.s32 %s22, %s31
      %s74 = sor.u32 %s72, %s73
      %p75 = scmp.eq.s32.totalorder %s74, 0
      %s77 = sadd.s32 %s76, 1
      %s78 = scalar_select %p75, %s76, %s77
      %p81 = pneg %p75
      %p82 = scmp.eq.s32.totalorder %s13, 3
      %p83 = por %p81, %p82
      %p84 = scmp.ne.s32.totalorder %s76, %s79
      %p85 = scmp.eq.s32.totalorder %s13, 0
      %p86 = por %p84, %p85
      %p87 = scmp.ne.s32.totalorder %s76, %s79
      %p88 = scmp.eq.s32.totalorder %s18, 3
      %p89 = por %p87, %p88
      %p90 = scmp.ne.s32.totalorder %s79, %s80
      %p91 = scmp.eq.s32.totalorder %s18, 0
      %p92 = por %p90, %p91
      %p93 = scmp.ne.s32.totalorder %s79, %s80
      %p94 = scmp.eq.s32.totalorder %s19, 3
      %p95 = por %p93, %p94
      %p97 = scmp.ne.s32.totalorder %s80, %s96
      %p98 = scmp.eq.s32.totalorder %s19, 0
      %p99 = por %p97, %p98
      %p100 = scmp.le.s32.totalorder 1, %s13
      %p101 = scmp.lt.s32.totalorder %s13, 5
      %p102 = pnand %p100, %p101
      %p103 = pneg %p102
      // Predicated region
      $region9: #{tpu_custom_call.1} parent=5 // pred_check
        _
      $region10: #{tpu_custom_call.1} parent=5 // pred_check_branch
        %105 = sbr.rel (%p102) target = $region12
      $region11: #{tpu_custom_call.1} parent=5 // pred_region
        %s106 = ssub.s32 %s13, 1
      $region12: #{tpu_custom_call.1} parent=5 // pred_fallthru
        _
      %p107 = scmp.lt.s32.totalorder %s13, 4
      // Predicated region
      $region13: #{tpu_custom_call.1} parent=5 // pred_check
        %p108 = pneg %p107
      $region14: #{tpu_custom_call.1} parent=5 // pred_check_branch
        %110 = sbr.rel (%p108) target = $region16
      $region15: #{tpu_custom_call.1} parent=5 // pred_region
        // Predicated region
        $region17: #{tpu_custom_call.1} parent=15 // pred_check
          %p111 = pneg %p56
        $region18: #{tpu_custom_call.1} parent=15 // pred_check_branch
          %113 = sbr.rel (%p111) target = $region20
        $region19: #{tpu_custom_call.1} parent=15 // pred_region
          %s114 = sand.u32 %s46, 1
          %s115 = scalar_lea.sflag [#allocation3], %s114
          %s116 = sand.u32 %s46, 1
          %s117 = smul.addr %s116, 256
          %s118 = scalar_lea.vmem [#allocation2], %s117
          %s119 = smul.u32 8, %s22
          %s120 = smul.u32 4, %s21
          %s122 = ssub.s32 4096, 4096
          %123 = vsyncadd %s115, %s122
          %s124 = smul.addr %s119, 4
          %s125 = sadd.s32 %s120, %s124
          %s126 = smul.addr %s20, 64
          %s127 = sadd.s32 %s125, %s126
          %s128 = smul.addr %s127, 128
          %s129 = scalar_lea.hbm %s0, %s128
          %s130 = sshll.u32 %s118, 4
          %s131 = int_to_ptr.vmem [resolvable:$true] %s130
          %136 = dma.hbm_to_vmem [thread:$0]  %s129, 4096, %s131, %s115, 128, 128, 8
        $region20: #{tpu_custom_call.1} parent=15 // pred_fallthru
          _
      $region16: #{tpu_custom_call.1} parent=5 // pred_fallthru
        _
      %p137 = scmp.le.s32.totalorder 1, %s13
      %p138 = scmp.lt.s32.totalorder %s13, 5
      %p139 = pnand %p137, %p138
      %p140 = pneg %p139
      // Predicated region
      $region21: #{tpu_custom_call.1} parent=5 // pred_check
        _
      $region22: #{tpu_custom_call.1} parent=5 // pred_check_branch
        %142 = sbr.rel (%p139) target = $region24
      $region23: #{tpu_custom_call.1} parent=5 // pred_region
        %s143 = ssub.s32 %s13, 1
        %s144 = sand.u32 %s49, 1
        %s145 = scalar_lea.sflag [#allocation3], %s144
        %s146 = sand.u32 %s49, 1
        %s147 = smul.addr %s146, 256
        %s148 = scalar_lea.vmem [#allocation2], %s147
        // Predicated region
        $region25: #{tpu_custom_call.1} parent=23 // pred_check
          %p149 = pneg %p62
        $region26: #{tpu_custom_call.1} parent=23 // pred_check_branch
          %151 = sbr.rel (%p149) target = $region28
        $region27: #{tpu_custom_call.1} parent=23 // pred_region
          %152 = dma.done %s145, 4096
        $region28: #{tpu_custom_call.1} parent=23 // pred_fallthru
          _
        %s153 = sand.u32 %s49, 1
        %s154 = scalar_lea.sflag [#allocation3], %s153
        %s155 = sand.u32 %s49, 1
        %s156 = smul.addr %s155, 256
        %s157 = scalar_lea.vmem [#allocation2], %s156
        %p158 = pneg %p62
        %p159 = pneg %p59
        %p160 = pneg %p92
        %p161 = pneg %p89
        %s162 = sand.u32 %s79, 1
        %s163 = scalar_lea.sflag [#allocation4], %s162
        %s164 = sand.u32 %s79, 1
        %s165 = smul.addr %s164, 256
        %s166 = scalar_lea.vmem [#allocation5], %s165
        %s167 = smul.u32 8, %s25
        %s168 = smul.u32 4, %s24
        %s169 = smul.u32 4, %s24
        %s170 = smul.u32 8, %s25
        %v171 = vld [vmem:[%s148] sm:$0xff]
        %v172 = vld [vmem:[%s148 + $0x8] sm:$0xff]
        %v173 = vld [vmem:[%s148 + $0x10] sm:$0xff]
        %v174 = vld [vmem:[%s148 + $0x18] sm:$0xff]
        %175 = vst [vmem:[%s166] sm:$0xff] %v171
        %176 = vst [vmem:[%s166 + $0x40] sm:$0xff] %v172
        %177 = vst [vmem:[%s166 + $0x80] sm:$0xff] %v173
        %178 = vst [vmem:[%s166 + $0xc0] sm:$0xff] %v174
        %s179 = scalar_lea.vmem %s148, 32 [#allocation2]
        %v180 = vld [vmem:[%s179] sm:$0xff]
        %v181 = vld [vmem:[%s179 + $0x8] sm:$0xff]
        %v182 = vld [vmem:[%s179 + $0x10] sm:$0xff]
        %v183 = vld [vmem:[%s179 + $0x18] sm:$0xff]
        %184 = vst [vmem:[%s166 + $0x8] sm:$0xff] %v180
        %185 = vst [vmem:[%s166 + $0x48] sm:$0xff] %v181
        %186 = vst [vmem:[%s166 + $0x88] sm:$0xff] %v182
        %187 = vst [vmem:[%s166 + $0xc8] sm:$0xff] %v183
        %s188 = scalar_lea.vmem %s148, 64 [#allocation2]
        %v189 = vld [vmem:[%s188] sm:$0xff]
        %v190 = vld [vmem:[%s188 + $0x8] sm:$0xff]
        %v191 = vld [vmem:[%s188 + $0x10] sm:$0xff]
        %v192 = vld [vmem:[%s188 + $0x18] sm:$0xff]
        %193 = vst [vmem:[%s166 + $0x10] sm:$0xff] %v189
        %194 = vst [vmem:[%s166 + $0x50] sm:$0xff] %v190
        %195 = vst [vmem:[%s166 + $0x90] sm:$0xff] %v191
        %196 = vst [vmem:[%s166 + $0xd0] sm:$0xff] %v192
        %s197 = scalar_lea.vmem %s148, 96 [#allocation2]
        %v198 = vld [vmem:[%s197] sm:$0xff]
        %v199 = vld [vmem:[%s197 + $0x8] sm:$0xff]
        %v200 = vld [vmem:[%s197 + $0x10] sm:$0xff]
        %v201 = vld [vmem:[%s197 + $0x18] sm:$0xff]
        %202 = vst [vmem:[%s166 + $0x18] sm:$0xff] %v198
        %203 = vst [vmem:[%s166 + $0x58] sm:$0xff] %v199
        %204 = vst [vmem:[%s166 + $0x98] sm:$0xff] %v200
        %205 = vst [vmem:[%s166 + $0xd8] sm:$0xff] %v201
        %s206 = scalar_lea.vmem %s148, 128 [#allocation2]
        %v207 = vld [vmem:[%s206] sm:$0xff]
        %v208 = vld [vmem:[%s206 + $0x8] sm:$0xff]
        %v209 = vld [vmem:[%s206 + $0x10] sm:$0xff]
        %v210 = vld [vmem:[%s206 + $0x18] sm:$0xff]
        %211 = vst [vmem:[%s166 + $0x20] sm:$0xff] %v207
        %212 = vst [vmem:[%s166 + $0x60] sm:$0xff] %v208
        %213 = vst [vmem:[%s166 + $0xa0] sm:$0xff] %v209
        %214 = vst [vmem:[%s166 + $0xe0] sm:$0xff] %v210
        %s215 = scalar_lea.vmem %s148, 160 [#allocation2]
        %v216 = vld [vmem:[%s215] sm:$0xff]
        %v217 = vld [vmem:[%s215 + $0x8] sm:$0xff]
        %v218 = vld [vmem:[%s215 + $0x10] sm:$0xff]
        %v219 = vld [vmem:[%s215 + $0x18] sm:$0xff]
        %220 = vst [vmem:[%s166 + $0x28] sm:$0xff] %v216
        %221 = vst [vmem:[%s166 + $0x68] sm:$0xff] %v217
        %222 = vst [vmem:[%s166 + $0xa8] sm:$0xff] %v218
        %223 = vst [vmem:[%s166 + $0xe8] sm:$0xff] %v219
        %s224 = scalar_lea.vmem %s148, 192 [#allocation2]
        %v225 = vld [vmem:[%s224] sm:$0xff]
        %v226 = vld [vmem:[%s224 + $0x8] sm:$0xff]
        %v227 = vld [vmem:[%s224 + $0x10] sm:$0xff]
        %v228 = vld [vmem:[%s224 + $0x18] sm:$0xff]
        %229 = vst [vmem:[%s166 + $0x30] sm:$0xff] %v225
        %230 = vst [vmem:[%s166 + $0x70] sm:$0xff] %v226
        %231 = vst [vmem:[%s166 + $0xb0] sm:$0xff] %v227
        %232 = vst [vmem:[%s166 + $0xf0] sm:$0xff] %v228
        %s233 = scalar_lea.vmem %s148, 224 [#allocation2]
        %v234 = vld [vmem:[%s233] sm:$0xff]
        %v235 = vld [vmem:[%s233 + $0x8] sm:$0xff]
        %v236 = vld [vmem:[%s233 + $0x10] sm:$0xff]
        %v237 = vld [vmem:[%s233 + $0x18] sm:$0xff]
        %238 = vst [vmem:[%s166 + $0x38] sm:$0xff] %v234
        %239 = vst [vmem:[%s166 + $0x78] sm:$0xff] %v235
        %240 = vst [vmem:[%s166 + $0xb8] sm:$0xff] %v236
        %241 = vst [vmem:[%s166 + $0xf8] sm:$0xff] %v237
        %s242 = sand.u32 %s79, 1
        %s243 = scalar_lea.sflag [#allocation4], %s242
        %s244 = sand.u32 %s79, 1
        %s245 = smul.addr %s244, 256
        %s246 = scalar_lea.vmem [#allocation5], %s245
        // Predicated region
        $region29: #{tpu_custom_call.1} parent=23 // pred_check
          %p247 = pneg %p89
        $region30: #{tpu_custom_call.1} parent=23 // pred_check_branch
          %249 = sbr.rel (%p247) target = $region32
        $region31: #{tpu_custom_call.1} parent=23 // pred_region
          %s250 = smul.u32 4, %s24
          %s251 = smul.u32 8, %s25
          %s253 = ssub.s32 4096, 4096
          %254 = vsyncadd %s243, %s253
          %s255 = smul.addr %s250, 16
          %s256 = sadd.s32 %s251, %s255
          %s257 = smul.addr %s23, 64
          %s258 = sadd.s32 %s256, %s257
          %s259 = smul.addr %s258, 128
          %s260 = scalar_lea.hbm %s1, %s259
          %s261 = sshll.u32 %s246, 4
          %s262 = int_to_ptr.vmem [resolvable:$true] %s261
          %267 = dma.vmem_to_hbm [thread:$0]  %s262, 4096, %s260, %s243, 1024, 2048, 64
        $region32: #{tpu_custom_call.1} parent=23 // pred_fallthru
          _
      $region24: #{tpu_custom_call.1} parent=5 // pred_fallthru
        _
      %p268 = scmp.le.s32.totalorder 2, %s13
      // Predicated region
      $region33: #{tpu_custom_call.1} parent=5 // pred_check
        %p269 = pneg %p268
      $region34: #{tpu_custom_call.1} parent=5 // pred_check_branch
        %271 = sbr.rel (%p269) target = $region36
      $region35: #{tpu_custom_call.1} parent=5 // pred_region
        %s272 = ssub.s32 %s13, 2
        // Predicated region
        $region37: #{tpu_custom_call.1} parent=35 // pred_check
          %p273 = pneg %p95
        $region38: #{tpu_custom_call.1} parent=35 // pred_check_branch
          %275 = sbr.rel (%p273) target = $region40
        $region39: #{tpu_custom_call.1} parent=35 // pred_region
          %s276 = sand.u32 %s80, 1
          %s277 = scalar_lea.sflag [#allocation4], %s276
          %s278 = sand.u32 %s80, 1
          %s279 = smul.addr %s278, 256
          %s280 = scalar_lea.vmem [#allocation5], %s279
          %281 = dma.done %s277, 4096
        $region40: #{tpu_custom_call.1} parent=35 // pred_fallthru
          _
      $region36: #{tpu_custom_call.1} parent=5 // pred_fallthru
        _
    $region6: #{tpu_custom_call.1} parent=1 // loop_footer
      %s17 = sadd.s32 1, %s13
    $region7: #{tpu_custom_call.1} parent=1 // loop_footer_branch
      %12 = sbr.rel target = $region3
    $region8: #{tpu_custom_call.1} parent=1 // loop_exit
      _
    %282 = vsyncpa [#allocation3], 1
    %s283 = scalar_lea.sflag [#allocation3], 1
    %284 = vsyncpa %s283, 1
    %285 = vsyncpa [#allocation4], 1
    %s286 = scalar_lea.sflag [#allocation4], 1
    %287 = vsyncpa %s286, 1

</llo_original>
